<compile_context>
chip_gen: v6e
topology: v6e:2x2x1
jax: 0.10.0
libtpu: 0.0.40
codegen_flags: <defaults>
</compile_context>

<pallas_src>
import functools
import math

import jax
import jax.numpy as jnp
from jax.experimental import pallas as pl
from jax.experimental.pallas import tpu as pltpu


def _make_dice_kernel(*, has_roi, logit_t, f_total, tile, tiles_per_split,
                      mask_tail):
    """Builds the per-tile intersect/union accumulation kernel."""

    def kernel(*refs):
        if has_roi:
            x_ref, t_ref, r_ref, inter_ref, union_ref = refs
        else:
            x_ref, t_ref, inter_ref, union_ref = refs
            r_ref = None

        p = pl.program_id(0)   # parallel split over feature tiles
        k = pl.program_id(1)   # reduction over tiles within a split

        @pl.when(k == 0)
        def _():
            inter_ref[...] = jnp.zeros_like(inter_ref)
            union_ref[...] = jnp.zeros_like(union_ref)

        # Hard threshold: sigmoid(x) > thr  <=>  x > logit(thr)  (monotone).
        x = x_ref[...].astype(jnp.float32)
        pred = (x > logit_t).astype(jnp.float32)
        t = t_ref[...].astype(jnp.float32)

        if mask_tail:
            # Global column index of every lane in this tile vs. true F.
            gtile = p * tiles_per_split + k
            col = jax.lax.broadcasted_iota(jnp.int32, t.shape, t.ndim - 1)
            valid = (col + gtile * tile) < f_total
        else:
            valid = None

        if has_roi:
            r = r_ref[...].astype(jnp.float32)
            if mask_tail:
                # jnp.where (not *mask) so garbage in the padded tail cannot
                # propagate NaNs.
                t = jnp.where(valid, t, 0.0)
                r = jnp.where(valid, r, 0.0)
            tr = t * r
            inter_part = jnp.sum(pred * tr, axis=-1, keepdims=True)
            union_part = jnp.sum(pred * r + tr, axis=-1, keepdims=True)
        else:
            if mask_tail:
                pred = jnp.where(valid, pred, 0.0)
                t = jnp.where(valid, t, 0.0)
            inter_part = jnp.sum(pred * t, axis=-1, keepdims=True)
            union_part = jnp.sum(pred + t, axis=-1, keepdims=True)

        inter_ref[...] += inter_part[None, :, :]
        union_ref[...] += union_part[None, :, :]

    return kernel


def _flatten_native(a, n):
    a = a.reshape(n, -1)
    if a.dtype == jnp.bool_:
        a = a.astype(jnp.uint8)   # 1 byte/elem either way; avoids bool refs
    return a


def masked_hard_dice_loss(x, target, roi=None, *, threshold=0.5, smooth=1.0,
                          eps=1e-12, per_img=False, max_tile=8192,
                          num_splits=2,
                          input_vmem_budget=12 * 1024 * 1024):
    """JAX/Pallas equivalent of MaskedHardDiceLoss.forward."""
    n = x.shape[0]
    f = 1
    for d in x.shape[1:]:
        f *= d

    xf = _flatten_native(x, n)
    tf_ = _flatten_native(target, n)
    has_roi = roi is not None
    streams = [xf, tf_]
    if has_roi:
        streams.append(_flatten_native(roi, n))

    # ---- tile selection: biggest lane-multiple whose double-buffered input
    #      streams fit a conservative VMEM budget (safe on v5e/v6e/v7x). ----
    itemsize_sum = sum(int(s.dtype.itemsize) for s in streams)
    per_col_bytes = 2 * n * itemsize_sum                  # 2 pipeline buffers
    fit_cols = max(int(input_vmem_budget // per_col_bytes), 1)
    if f <= fit_cols and f <= max_tile:
        tile = f            # block == full dim: single tile, no tail masking
    else:
        tile = min(fit_cols, max_tile)
        tile = max((tile // 128) * 128, 128)

    num_tiles = int(pl.cdiv(f, tile))
    splits = max(1, min(int(num_splits), num_tiles))      # parallel (v7x 2-TC)
    tps = int(pl.cdiv(num_tiles, splits))                 # tiles per split
    coverage = splits * tps * tile
    mask_tail = coverage > f
    max_block = num_tiles - 1

    if splits * tps == num_tiles:
        def in_map(p, k, _tps=tps):
            return (0, p * _tps + k)
    else:
        # Clamp so out-of-range tiles re-read the last valid block; the
        # in-kernel mask zeroes their contribution.
        def in_map(p, k, _tps=tps, _mb=max_block):
            return (0, jnp.minimum(p * _tps + k, _mb))

    def out_map(p, k):
        return (p, 0, 0)

    logit_t = float(math.log(threshold / (1.0 - threshold)))

    kernel = _make_dice_kernel(has_roi=has_roi, logit_t=logit_t, f_total=f,
                               tile=tile, tiles_per_split=tps,
                               mask_tail=mask_tail)

    in_specs = [pl.BlockSpec((n, tile), in_map) for _ in streams]
    out_specs = (pl.BlockSpec((1, n, 1), out_map),
                 pl.BlockSpec((1, n, 1), out_map))

    inter_p, union_p = pl.pallas_call(
        kernel,
        out_shape=(jax.ShapeDtypeStruct((splits, n, 1), jnp.float32),
                   jax.ShapeDtypeStruct((splits, n, 1), jnp.float32)),
        grid_spec=pltpu.PrefetchScalarGridSpec(
            num_scalar_prefetch=0,
            grid=(splits, tps),
            in_specs=in_specs,
            out_specs=out_specs,
        ),
        compiler_params=pltpu.CompilerParams(
            dimension_semantics=("parallel", "arbitrary"),
            vmem_limit_bytes=32 * 1024 * 1024),
    )(*streams)

    inter = jnp.sum(inter_p, axis=0)[:, 0]
    union = jnp.sum(union_p, axis=0)[:, 0]

    if per_img:
        return jnp.mean(1.0 - (2.0 * inter + smooth) / (union + eps + smooth))
    return 1.0 - (2.0 * jnp.sum(inter) + smooth) / (jnp.sum(union) + eps + smooth)


def _reference(x, target, roi, threshold, smooth, eps, per_img):
    n = x.shape[0]
    pred = (jax.nn.sigmoid(x.astype(jnp.float32)) > threshold).astype(jnp.float32)
    tgt = target.astype(jnp.float32)
    if roi is None:
        roi = jnp.ones_like(pred)
    else:
        roi = roi.astype(jnp.float32)
    inter = (pred * tgt * roi).reshape(n, -1).sum(1)
    union = ((pred + tgt) * roi).reshape(n, -1).sum(1)
    if per_img:
        return jnp.mean(1.0 - (2.0 * inter + smooth) / (union + eps + smooth))
    return 1.0 - (2.0 * inter.sum() + smooth) / (union.sum() + eps + smooth)


if __name__ == "__main__":
    key = jax.random.PRNGKey(0)
    k1, k2, k3 = jax.random.split(key, 3)
    ok = True

    # Lane-aligned feature axis: F = 4*16*16 = 1024 -> single full-width tile.
    N, C, H, W = 2, 4, 16, 16
    x = jax.random.normal(k1, (N, C, H, W), dtype=jnp.float32)
    target = (jax.random.uniform(k2, (N, C, H, W)) > 0.5).astype(jnp.float32)
    roi = (jax.random.uniform(k3, (N, C, H, W)) > 0.3).astype(jnp.float32)

    for per_img in (False, True):
        loss = jax.block_until_ready(
            masked_hard_dice_loss(x, target, roi, per_img=per_img))
        ref = _reference(x, target, roi, 0.5, 1.0, 1e-12, per_img)
        ok &= bool(jnp.allclose(loss, ref, atol=1e-5, rtol=1e-5))

    # roi=None path (2-input kernel, no all-ones mask materialized).
    loss_noroi = jax.block_until_ready(masked_hard_dice_loss(x, target, None))
    ref_noroi = _reference(x, target, None, 0.5, 1.0, 1e-12, False)
    ok &= bool(jnp.allclose(loss_noroi, ref_noroi, atol=1e-5, rtol=1e-5))

    # Multi-tile, evenly divisible (F=1024, tile=256): 2-way split, no masking.
    loss_mt = jax.block_until_ready(
        masked_hard_dice_loss(x, target, roi, max_tile=256))
    ok &= bool(jnp.allclose(loss_mt, _reference(x, target, roi, 0.5, 1.0, 1e-12,
                                                False), atol=1e-5, rtol=1e-5))

    # Ragged feature axis (F = 4*15*15 = 900) with a small forced tile so the
    # clamped index map + in-kernel tail masking + parallel split all run.
    H2 = W2 = 15
    x2 = jax.random.normal(k1, (N, C, H2, W2), dtype=jnp.float32)
    target2 = (jax.random.uniform(k2, (N, C, H2, W2)) > 0.5).astype(jnp.float32)
    roi2 = (jax.random.uniform(k3, (N, C, H2, W2)) > 0.3).astype(jnp.float32)
    for r in (roi2, None):
        loss2 = jax.block_until_ready(
            masked_hard_dice_loss(x2, target2, r, max_tile=384))
        ref2 = _reference(x2, target2, r, 0.5, 1.0, 1e-12, False)
        ok &= bool(jnp.allclose(loss2, ref2, atol=1e-5, rtol=1e-5))

    # bf16 input streams at native width (cast happens inside the kernel).
    xb = x.astype(jnp.bfloat16)
    loss_b = jax.block_until_ready(masked_hard_dice_loss(xb, target, roi))
    ref_b = _reference(xb, target, roi, 0.5, 1.0, 1e-12, False)
    ok &= bool(jnp.allclose(loss_b, ref_b, atol=1e-5, rtol=1e-5))

    if ok:
        print("KERNEL_OK")
    else:
        print("KERNEL_MISMATCH")
</pallas_src>

<mosaic_0001>
module attributes {stable_mosaic.version = 11 : i64} {
  func.func @kernel(%arg0: i32, %arg1: i32, %arg2: memref<2x1024xf32, #tpu.memory_space<vmem>>, %arg3: memref<2x1024xf32, #tpu.memory_space<vmem>>, %arg4: memref<2x1024xf32, #tpu.memory_space<vmem>>, %arg5: memref<1x2x1xf32, #tpu.memory_space<vmem>>, %arg6: memref<1x2x1xf32, #tpu.memory_space<vmem>>) attributes {dimension_semantics = [#tpu.dimension_semantics<parallel>, #tpu.dimension_semantics<arbitrary>], iteration_bounds = array<i64: 1, 1>, scalar_prefetch = 0 : i64, scratch_operands = 0 : i64, tpu.core_type = #tpu.core_type<tc>, window_params = [{transform_indices = @transform_0, window_bounds = array<i64: 2, 1024>}, {transform_indices = @transform_1, window_bounds = array<i64: 2, 1024>}, {transform_indices = @transform_2, window_bounds = array<i64: 2, 1024>}, {transform_indices = @transform_3, window_bounds = array<i64: 1, 2, 1>}, {transform_indices = @transform_4, window_bounds = array<i64: 1, 2, 1>}]} {
    %c0_i32 = arith.constant 0 : i32
    %0 = arith.cmpi eq, %arg1, %c0_i32 : i32
    %1 = arith.extui %0 : i1 to i32
    %c0_i32_0 = arith.constant 0 : i32
    %2 = arith.cmpi ne, %1, %c0_i32_0 : i32
    scf.if %2 {
      %cst_20 = arith.constant 0.000000e+00 : f32
      %26 = vector.broadcast %cst_20 : f32 to vector<1x2x1xf32>
      %c0_21 = arith.constant 0 : index
      %c0_22 = arith.constant 0 : index
      %c0_23 = arith.constant 0 : index
      %27 = vector.load %arg5[%c0_21, %c0_22, %c0_23] : memref<1x2x1xf32, #tpu.memory_space<vmem>>, vector<1x2x1xf32>
      tpu.vector_store %arg5[%c0_21, %c0_22, %c0_23], %26 {strides = array<i32>} : memref<1x2x1xf32, #tpu.memory_space<vmem>>, vector<1x2x1xf32>,
      %cst_24 = arith.constant 0.000000e+00 : f32
      %28 = vector.broadcast %cst_24 : f32 to vector<1x2x1xf32>
      %c0_25 = arith.constant 0 : index
      %c0_26 = arith.constant 0 : index
      %c0_27 = arith.constant 0 : index
      %29 = vector.load %arg6[%c0_25, %c0_26, %c0_27] : memref<1x2x1xf32, #tpu.memory_space<vmem>>, vector<1x2x1xf32>
      tpu.vector_store %arg6[%c0_25, %c0_26, %c0_27], %28 {strides = array<i32>} : memref<1x2x1xf32, #tpu.memory_space<vmem>>, vector<1x2x1xf32>,
    } else {
    }
    %c0 = arith.constant 0 : index
    %c0_1 = arith.constant 0 : index
    %3 = vector.load %arg2[%c0, %c0_1] : memref<2x1024xf32, #tpu.memory_space<vmem>>, vector<2x1024xf32>
    %cst = arith.constant 0.000000e+00 : f32
    %4 = vector.broadcast %cst : f32 to vector<2x1024xf32>
    %5 = arith.cmpf ogt, %3, %4 : vector<2x1024xf32>
    %6 = arith.extui %5 : vector<2x1024xi1> to vector<2x1024xi32>
    %7 = arith.sitofp %6 : vector<2x1024xi32> to vector<2x1024xf32>
    %c0_2 = arith.constant 0 : index
    %c0_3 = arith.constant 0 : index
    %8 = vector.load %arg3[%c0_2, %c0_3] : memref<2x1024xf32, #tpu.memory_space<vmem>>, vector<2x1024xf32>
    %c0_4 = arith.constant 0 : index
    %c0_5 = arith.constant 0 : index
    %9 = vector.load %arg4[%c0_4, %c0_5] : memref<2x1024xf32, #tpu.memory_space<vmem>>, vector<2x1024xf32>
    %10 = arith.mulf %8, %9 : vector<2x1024xf32>
    %11 = arith.mulf %7, %10 : vector<2x1024xf32>
    %cst_6 = arith.constant dense<0.000000e+00> : vector<2xf32>
    %12 = vector.multi_reduction <add>, %11, %cst_6 [1] : vector<2x1024xf32> to vector<2xf32>
    %13 = vector.shape_cast %12 : vector<2xf32> to vector<2x1xf32>
    %14 = arith.mulf %7, %9 : vector<2x1024xf32>
    %15 = arith.addf %14, %10 : vector<2x1024xf32>
    %cst_7 = arith.constant dense<0.000000e+00> : vector<2xf32>
    %16 = vector.multi_reduction <add>, %15, %cst_7 [1] : vector<2x1024xf32> to vector<2xf32>
    %17 = vector.shape_cast %16 : vector<2xf32> to vector<2x1xf32>
    %c0_8 = arith.constant 0 : index
    %c0_9 = arith.constant 0 : index
    %c0_10 = arith.constant 0 : index
    %18 = vector.load %arg5[%c0_8, %c0_9, %c0_10] : memref<1x2x1xf32, #tpu.memory_space<vmem>>, vector<1x2x1xf32>
    %19 = vector.shape_cast %13 : vector<2x1xf32> to vector<1x2x1xf32>
    %20 = arith.addf %18, %19 : vector<1x2x1xf32>
    %c0_11 = arith.constant 0 : index
    %c0_12 = arith.constant 0 : index
    %c0_13 = arith.constant 0 : index
    %21 = vector.load %arg5[%c0_11, %c0_12, %c0_13] : memref<1x2x1xf32, #tpu.memory_space<vmem>>, vector<1x2x1xf32>
    tpu.vector_store %arg5[%c0_11, %c0_12, %c0_13], %20 {strides = array<i32>} : memref<1x2x1xf32, #tpu.memory_space<vmem>>, vector<1x2x1xf32>,
    %c0_14 = arith.constant 0 : index
    %c0_15 = arith.constant 0 : index
    %c0_16 = arith.constant 0 : index
    %22 = vector.load %arg6[%c0_14, %c0_15, %c0_16] : memref<1x2x1xf32, #tpu.memory_space<vmem>>, vector<1x2x1xf32>
    %23 = vector.shape_cast %17 : vector<2x1xf32> to vector<1x2x1xf32>
    %24 = arith.addf %22, %23 : vector<1x2x1xf32>
    %c0_17 = arith.constant 0 : index
    %c0_18 = arith.constant 0 : index
    %c0_19 = arith.constant 0 : index
    %25 = vector.load %arg6[%c0_17, %c0_18, %c0_19] : memref<1x2x1xf32, #tpu.memory_space<vmem>>, vector<1x2x1xf32>
    tpu.vector_store %arg6[%c0_17, %c0_18, %c0_19], %24 {strides = array<i32>} : memref<1x2x1xf32, #tpu.memory_space<vmem>>, vector<1x2x1xf32>,
    return
  }
  func.func @transform_0(%arg0: i32, %arg1: i32) -> (i32, i32) {
    %c1_i32 = arith.constant 1 : i32
    %0 = arith.muli %arg0, %c1_i32 : i32
    %1 = arith.addi %0, %arg1 : i32
    %c0_i32 = arith.constant 0 : i32
    %c0_i32_0 = arith.constant 0 : i32
    return %c0_i32, %1 : i32, i32
  }
  func.func @transform_1(%arg0: i32, %arg1: i32) -> (i32, i32) {
    %c1_i32 = arith.constant 1 : i32
    %0 = arith.muli %arg0, %c1_i32 : i32
    %1 = arith.addi %0, %arg1 : i32
    %c0_i32 = arith.constant 0 : i32
    %c0_i32_0 = arith.constant 0 : i32
    return %c0_i32, %1 : i32, i32
  }
  func.func @transform_2(%arg0: i32, %arg1: i32) -> (i32, i32) {
    %c1_i32 = arith.constant 1 : i32
    %0 = arith.muli %arg0, %c1_i32 : i32
    %1 = arith.addi %0, %arg1 : i32
    %c0_i32 = arith.constant 0 : i32
    %c0_i32_0 = arith.constant 0 : i32
    return %c0_i32, %1 : i32, i32
  }
  func.func @transform_3(%arg0: i32, %arg1: i32) -> (i32, i32, i32) {
    %c0_i32 = arith.constant 0 : i32
    %c0_i32_0 = arith.constant 0 : i32
    %c0_i32_1 = arith.constant 0 : i32
    return %arg0, %c0_i32, %c0_i32_0 : i32, i32, i32
  }
  func.func @transform_4(%arg0: i32, %arg1: i32) -> (i32, i32, i32) {
    %c0_i32 = arith.constant 0 : i32
    %c0_i32_0 = arith.constant 0 : i32
    %c0_i32_1 = arith.constant 0 : i32
    return %arg0, %c0_i32, %c0_i32_0 : i32, i32, i32
  }
}

</mosaic_0001>

<llo_original>
// kernel: tpu_custom_call.1
$region0: #{tpu_custom_call.1}
  #allocation0 [shape = 'u32[]', space=smem, size = 0x4, offset = 0x4, fixed_abs, tag = 'smem constant byte address 0x4 - core index']
  #allocation1 [shape = 'u32[144,128]{1,0:T(1,128)}', space=vmem, size = 0x12000, scoped, tag = 'internal scratch']
  %s0 = inlined_call_operand.hbm [shape: f32[2,1024], index: 0, kind: input, shape index: {}]
  %s1 = inlined_call_operand.hbm [shape: f32[2,1024], index: 1, kind: input, shape index: {}]
  %s2 = inlined_call_operand.hbm [shape: f32[2,1024], index: 2, kind: input, shape index: {}]
  %s3 = inlined_call_operand.vmem [shape: f32[1,2,1], index: 3, kind: output, shape index: {0}]
  %s4 = inlined_call_operand.vmem [shape: f32[1,2,1], index: 4, kind: output, shape index: {1}]
  %5 = xla_tuple %s3, %s4
  %s6 = sld [smem:[#allocation0]]
  $region46: #{tpu_custom_call.1} parent=0
    _
  %s8 = ssub.s32 1, %s6
  %s9 = scalar_select 0, %s8, %s6
  $region1: #{tpu_custom_call.1} parent=0
    #allocation2 [shape = 'u8[8192]{0}', space=vmem, size = 0x2000, scoped, tag = 'input window, operand 0, single buffered']
    #allocation3 [shape = 's32[1]{0}', space=sflag, size = 0x4, scoped, tag = 'scoped memory for tpu_custom_call.1']
    #allocation4 [shape = 'u8[8192]{0}', space=vmem, size = 0x2000, scoped, tag = 'input window, operand 1, single buffered']
    #allocation5 [shape = 's32[1]{0}', space=sflag, size = 0x4, scoped, tag = 'scoped memory for tpu_custom_call.1']
    #allocation6 [shape = 'u8[8192]{0}', space=vmem, size = 0x2000, scoped, tag = 'input window, operand 2, single buffered']
    %10 = vsyncpa [#allocation3], 0
    %11 = vsyncpa [#allocation5], 0
    // Predicated region
    $region2: #{tpu_custom_call.1} parent=1 // pred_check
      _
    $region3: #{tpu_custom_call.1} parent=1 // pred_check_branch
      %13 = sbr.rel (0) target = $region5
    $region4: #{tpu_custom_call.1} parent=1 // pred_region
      %s14 = sadd.s32 0, 0
      %s15 = smul.u32 8, %s14
      %s17 = ssub.s32 256, 256
      %18 = vsyncadd [#allocation3], %s17
      %s19 = smul.addr %s15, 32
      %s20 = scalar_lea.hbm %s0, %s19
      %s22 = sshll.u32 [#allocation2], 4
      %s23 = int_to_ptr.vmem [resolvable:$true] %s22
      %25 = dma.hbm_to_vmem [thread:$0]  %s20, 256, %s23, [#allocation3]
    $region5: #{tpu_custom_call.1} parent=1 // pred_fallthru
      _
    // Predicated region
    $region6: #{tpu_custom_call.1} parent=1 // pred_check
      _
    $region7: #{tpu_custom_call.1} parent=1 // pred_check_branch
      %27 = sbr.rel (0) target = $region9
    $region8: #{tpu_custom_call.1} parent=1 // pred_region
      %s28 = sadd.s32 0, 0
      %s29 = smul.u32 8, %s28
      %s31 = ssub.s32 256, 256
      %32 = vsyncadd [#allocation5], %s31
      %s33 = smul.addr %s29, 32
      %s34 = scalar_lea.hbm %s1, %s33
      %s36 = sshll.u32 [#allocation4], 4
      %s37 = int_to_ptr.vmem [resolvable:$true] %s36
      %39 = dma.hbm_to_vmem [thread:$0]  %s34, 256, %s37, [#allocation5]
    $region9: #{tpu_custom_call.1} parent=1 // pred_fallthru
      _
    // Predicated region
    $region10: #{tpu_custom_call.1} parent=1 // pred_check
      _
    $region11: #{tpu_custom_call.1} parent=1 // pred_check_branch
      %41 = sbr.rel (0) target = $region13
    $region12: #{tpu_custom_call.1} parent=1 // pred_region
      %s42 = sadd.s32 0, 0
      %s43 = smul.u32 8, %s42
      %s45 = ssub.s32 256, 256
      %46 = vsyncadd [#allocation5], %s45
      %s47 = smul.addr %s43, 32
      %s48 = scalar_lea.hbm %s2, %s47
      %s50 = sshll.u32 [#allocation6], 4
      %s51 = int_to_ptr.vmem [resolvable:$true] %s50
      %53 = dma.hbm_to_vmem [thread:$0]  %s48, 256, %s51, [#allocation5]
    $region13: #{tpu_custom_call.1} parent=1 // pred_fallthru
      _
    // Predicated region
    $region14: #{tpu_custom_call.1} parent=1 // pred_check
      _
    $region15: #{tpu_custom_call.1} parent=1 // pred_check_branch
      %55 = sbr.rel (0) target = $region17
    $region16: #{tpu_custom_call.1} parent=1 // pred_region
      %56 = dma.done [#allocation3], 256
    $region17: #{tpu_custom_call.1} parent=1 // pred_fallthru
      _
    // Predicated region
    $region18: #{tpu_custom_call.1} parent=1 // pred_check
      _
    $region19: #{tpu_custom_call.1} parent=1 // pred_check_branch
      %58 = sbr.rel (0) target = $region21
    $region20: #{tpu_custom_call.1} parent=1 // pred_region
      %59 = dma.done [#allocation5], 256
    $region21: #{tpu_custom_call.1} parent=1 // pred_fallthru
      _
    // Predicated region
    $region22: #{tpu_custom_call.1} parent=1 // pred_check
      _
    $region23: #{tpu_custom_call.1} parent=1 // pred_check_branch
      %61 = sbr.rel (0) target = $region25
    $region24: #{tpu_custom_call.1} parent=1 // pred_region
      %62 = dma.done [#allocation5], 256
    $region25: #{tpu_custom_call.1} parent=1 // pred_fallthru
      _
    %s63 = sadd.s32 0, 0
    %s64 = smul.u32 8, %s63
    %s65 = sadd.s32 0, 0
    %s66 = smul.u32 8, %s65
    %s67 = sadd.s32 0, 0
    %s68 = smul.u32 8, %s67
    %p69 = scmp.eq.s32.totalorder 0, 0
    // Predicated region
    $region26: #{tpu_custom_call.1} parent=1 // pred_check
      %p70 = pneg %p69
    $region27: #{tpu_custom_call.1} parent=1 // pred_check_branch
      %72 = sbr.rel (%p70) target = $region29
    $region28: #{tpu_custom_call.1} parent=1 // pred_region
      %vm73 = vcmask 1024
      %74 = vst.msk [vmem:[%s3] sm:$0x3] %vm73, 0.0
      %75 = vst.msk [vmem:[%s4] sm:$0x3] %vm73, 0.0
    $region29: #{tpu_custom_call.1} parent=1 // pred_fallthru
      _
    %v76 = vld [vmem:[#allocation2] sm:$0xff]
    %v77 = vld [vmem:[#allocation2 + $0x8] sm:$0xff]
    %vm78 = vcmp.gt.f32.partialorder %v76, 0.0
    %vm79 = vcmp.gt.f32.partialorder %v77, 0.0
    %v80 = vsel %vm78, 1, 0
    %v81 = vsel %vm79, 1, 0
    %v82 = vcvt.s32.f32 %v80
    %v83 = vcvt.s32.f32 %v81
    %v84 = vld [vmem:[#allocation4] sm:$0xff]
    %v85 = vld [vmem:[#allocation4 + $0x8] sm:$0xff]
    %v86 = vld [vmem:[#allocation6] sm:$0xff]
    %v87 = vld [vmem:[#allocation6 + $0x8] sm:$0xff]
    %v88 = vmul.f32 %v84, %v86
    %v89 = vmul.f32 %v85, %v87
    %v90 = vmul.f32 %v82, %v88
    %v91 = vmul.f32 %v83, %v89
    %v94 = vcombine.high %v90, %v90
    %v96 = vunpack.c.l.s4 1983009808
    %v97 = vunpack.c.0.s8 %v96
    %v98 = vlaneseq
    %v99 = vshrl.u32 %v98, 7
    %v100 = vsub.s32 %v97, %v99
    %v101 = vrot.slane %v90, %v100
    %v103 = vunpack.c.l.s4 1983009808
    %v104 = vunpack.c.0.s8 %v103
    %v105 = vlaneseq
    %v106 = vshrl.u32 %v105, 7
    %v107 = vsub.s32 %v104, %v106
    %v108 = vrot.slane %v94, %v107
    %v109 = vcombine.high %v101, %v101
    %v110 = vcombine.high %v108, %v108
    %v111 = vcombine.high %v91, %v91
    %v113 = vunpack.c.l.s4 1983009808
    %v114 = vunpack.c.0.s8 %v113
    %v115 = vlaneseq
    %v116 = vshrl.u32 %v115, 7
    %v117 = vsub.s32 %v114, %v116
    %v118 = vrot.slane %v91, %v117
    %v120 = vunpack.c.l.s4 1983009808
    %v121 = vunpack.c.0.s8 %v120
    %v122 = vlaneseq
    %v123 = vshrl.u32 %v122, 7
    %v124 = vsub.s32 %v121, %v123
    %v125 = vrot.slane %v111, %v124
    %v126 = vcombine.high %v118, %v118
    %v127 = vcombine.high %v125, %v125
    %vm136 = vcmask 1041408
    %v137 = vsel %vm136, %v101, 0.0
    %v138 = vsel %vm136, %v109, 0.0
    %v139 = vadd.f32 %v137, %v138
    %v140 = vsel %vm136, %v108, 0.0
    %v141 = vadd.f32 %v139, %v140
    %v142 = vsel %vm136, %v110, 0.0
    %v143 = vadd.f32 %v141, %v142
    %v144 = vsel %vm136, %v118, 0.0
    %v145 = vadd.f32 %v143, %v144
    %v146 = vsel %vm136, %v126, 0.0
    %v147 = vadd.f32 %v145, %v146
    %v148 = vsel %vm136, %v125, 0.0
    %v149 = vadd.f32 %v147, %v148
    %v150 = vsel %vm136, %v127, 0.0
    %v151 = vadd.f32 %v149, %v150
    %152 = vadd.xlane.f32.xlu0 %v151
    %v153 = vpop.xlane.xlu0 %152
    %v154 = vmul.f32 %v82, %v86
    %v155 = vmul.f32 %v83, %v87
    %v156 = vadd.f32 %v154, %v88
    %v157 = vadd.f32 %v155, %v89
    %v160 = vcombine.high %v156, %v156
    %v162 = vunpack.c.l.s4 1983009808
    %v163 = vunpack.c.0.s8 %v162
    %v164 = vlaneseq
    %v165 = vshrl.u32 %v164, 7
    %v166 = vsub.s32 %v163, %v165
    %v167 = vrot.slane %v156, %v166
    %v169 = vunpack.c.l.s4 1983009808
    %v170 = vunpack.c.0.s8 %v169
    %v171 = vlaneseq
    %v172 = vshrl.u32 %v171, 7
    %v173 = vsub.s32 %v170, %v172
    %v174 = vrot.slane %v160, %v173
    %v175 = vcombine.high %v167, %v167
    %v176 = vcombine.high %v174, %v174
    %v177 = vcombine.high %v157, %v157
    %v179 = vunpack.c.l.s4 1983009808
    %v180 = vunpack.c.0.s8 %v179
    %v181 = vlaneseq
    %v182 = vshrl.u32 %v181, 7
    %v183 = vsub.s32 %v180, %v182
    %v184 = vrot.slane %v157, %v183
    %v186 = vunpack.c.l.s4 1983009808
    %v187 = vunpack.c.0.s8 %v186
    %v188 = vlaneseq
    %v189 = vshrl.u32 %v188, 7
    %v190 = vsub.s32 %v187, %v189
    %v191 = vrot.slane %v177, %v190
    %v192 = vcombine.high %v184, %v184
    %v193 = vcombine.high %v191, %v191
    %v202 = vsel %vm136, %v167, 0.0
    %v203 = vsel %vm136, %v175, 0.0
    %v204 = vadd.f32 %v202, %v203
    %v205 = vsel %vm136, %v174, 0.0
    %v206 = vadd.f32 %v204, %v205
    %v207 = vsel %vm136, %v176, 0.0
    %v208 = vadd.f32 %v206, %v207
    %v209 = vsel %vm136, %v184, 0.0
    %v210 = vadd.f32 %v208, %v209
    %v211 = vsel %vm136, %v192, 0.0
    %v212 = vadd.f32 %v210, %v211
    %v213 = vsel %vm136, %v191, 0.0
    %v214 = vadd.f32 %v212, %v213
    %v215 = vsel %vm136, %v193, 0.0
    %v216 = vadd.f32 %v214, %v215
    %217 = vadd.xlane.f32.xlu0 %v216
    %v218 = vpop.xlane.xlu0 %217
    %v219 = vld [vmem:[%s3] sm:$0x3]
    %v220 = vadd.f32 %v219, %v153
    %vm221 = vcmask 1024
    %222 = vst.msk [vmem:[%s3] sm:$0x3] %vm221, %v220
    %v223 = vld [vmem:[%s4] sm:$0x3]
    %v224 = vadd.f32 %v223, %v218
    %225 = vst.msk [vmem:[%s4] sm:$0x3] %vm221, %v224
    // Predicated region
    $region30: #{tpu_custom_call.1} parent=1 // pred_check
      _
    $region31: #{tpu_custom_call.1} parent=1 // pred_check_branch
      %227 = sbr.rel (0) target = $region33
    $region32: #{tpu_custom_call.1} parent=1 // pred_region
      _
    $region33: #{tpu_custom_call.1} parent=1 // pred_fallthru
      _
    // Predicated region
    $region34: #{tpu_custom_call.1} parent=1 // pred_check
      _
    $region35: #{tpu_custom_call.1} parent=1 // pred_check_branch
      %229 = sbr.rel (0) target = $region37
    $region36: #{tpu_custom_call.1} parent=1 // pred_region
      _
    $region37: #{tpu_custom_call.1} parent=1 // pred_fallthru
      _
    // Predicated region
    $region38: #{tpu_custom_call.1} parent=1 // pred_check
      _
    $region39: #{tpu_custom_call.1} parent=1 // pred_check_branch
      %231 = sbr.rel (0) target = $region41
    $region40: #{tpu_custom_call.1} parent=1 // pred_region
      _
    $region41: #{tpu_custom_call.1} parent=1 // pred_fallthru
      _
    // Predicated region
    $region42: #{tpu_custom_call.1} parent=1 // pred_check
      _
    $region43: #{tpu_custom_call.1} parent=1 // pred_check_branch
      %233 = sbr.rel (0) target = $region45
    $region44: #{tpu_custom_call.1} parent=1 // pred_region
      _
    $region45: #{tpu_custom_call.1} parent=1 // pred_fallthru
      _
    %234 = vsyncpa [#allocation3], 1
    %235 = vsyncpa [#allocation5], 1

</llo_original>
